<compile_context>
chip_gen: v7x
topology: tpu7x:2x2x1
jax: 0.10.0
libtpu: 0.0.40
codegen_flags: <defaults>
</compile_context>

<pallas_src>
import functools

import jax
import jax.numpy as jnp
from jax.experimental import pallas as pl
from jax.experimental.pallas import tpu as pltpu


# ------------------------------ helpers ------------------------------------ #
def _round_up(x, m):
    return (x + m - 1) // m * m


def _vmem_capacity_bytes():
    """Per-core VMEM capacity; conservative (v7x, 64 MiB) fallback."""
    try:
        info = pltpu.get_tpu_info()
        cap = getattr(info, "vmem_capacity_bytes", None)
        if cap:
            return int(cap)
    except Exception:
        pass
    return 64 << 20


def _choose_tm(m_rows, k_pad, e_pad, o_pad, budget_bytes):
    """Largest row-tile whose *actual* VMEM footprint fits the budget.

    Accounting (review fix):
      * every input BlockSpec is double-buffered, including the constant
        index_map weight/bias blocks -> weight term x2;
      * intermediates per row: f32 h (E_pad*4) plus the bf16 copy of h made
        for the head matmul (E_pad*2);
      * xp tile (bf16) and out tile (f32) are double-buffered.
    """
    weights = 2 * ((k_pad * e_pad + e_pad * o_pad) * 2 + (e_pad + o_pad) * 4)
    per_row = 2 * (k_pad * 2) + 2 * (o_pad * 4) + e_pad * 4 + e_pad * 2
    m_cap = _round_up(max(m_rows, 16), 16)
    # Large power-of-two tiles (multiples of 256 preferred at scale); floor 16
    # to respect the bf16 (16, 128) min tile.
    for tm in (2048, 1024, 512, 256, 128, 64, 32, 16):
        if tm <= m_cap and weights + tm * per_row <= budget_bytes:
            return tm
    return 16


# ----------------------------- Pallas kernel ------------------------------- #
def model_com_kernel(xp_ref, wf_ref, bf_ref, wh_ref, bh_ref, out_ref):
    """Fused forward pass for one tile of patch rows.

    xp_ref : (tm, K_pad)     bf16  flattened image patches (row tile)
    wf_ref : (K_pad, E_pad)  bf16  folded weight  (W_pe + W_in)
    bf_ref : (1, E_pad)      f32   folded bias    (b_pe + b_in)
    wh_ref : (E_pad, O_pad)  bf16  head weight
    bh_ref : (1, O_pad)      f32   head bias
    out_ref: (tm, O_pad)     f32   per-patch logits (padded lanes)
    """
    # image_encoder + input projection folded into one MXU pass (f32 acc).
    h = jnp.dot(xp_ref[...], wf_ref[...], preferred_element_type=jnp.float32)
    h = jnp.maximum(h + bf_ref[...], 0.0)          # fuse features + embeddings

    # head
    out = jnp.dot(h.astype(wh_ref.dtype), wh_ref[...],
                  preferred_element_type=jnp.float32)
    out_ref[...] = out + bh_ref[...]


# --------------------------- one-time weight prep --------------------------- #
def prepare_params(params):
    """Fold, pad and cast the weights ONCE (hoisted out of the forward).

    Forward-only algebraic identity:
        xp @ W_pe + b_pe + xp @ W_in + b_in == xp @ (W_pe + W_in) + (b_pe + b_in)
    (stop_gradient of the detached encoder branch is irrelevant: inference only.)
    """
    K, E = params["w_pe"].shape
    O = params["w_head"].shape[1]
    K_pad = _round_up(K, 128)
    E_pad = _round_up(E, 128)
    O_pad = _round_up(O, 128)

    w_fused = params["w_pe"] + params["w_in"]                    # (K, E) f32
    b_fused = params["b_pe"] + params["b_in"]                    # (1, E) f32

    prepped = {
        "wf": jnp.pad(w_fused, ((0, K_pad - K), (0, E_pad - E))).astype(jnp.bfloat16),
        "bf": jnp.pad(b_fused, ((0, 0), (0, E_pad - E))).astype(jnp.float32),
        "wh": jnp.pad(params["w_head"],
                      ((0, E_pad - E), (0, O_pad - O))).astype(jnp.bfloat16),
        "bh": jnp.pad(params["b_head"],
                      ((0, 0), (0, O_pad - O))).astype(jnp.float32),
    }
    return jax.tree_util.tree_map(jnp.asarray, prepped)


# ------------------------------- forward ------------------------------------ #
@functools.partial(jax.jit, static_argnames=("patch", "out_ch", "nhwc_out"))
def model_com_forward(x_nchw, prepped, *, patch, out_ch, nhwc_out=False):
    """x_nchw: (B, C, H, W) float32.  prepped: output of prepare_params.

    Returns (B, out_ch, H//patch, W//patch) by default (NCHW parity), or
    (B, H//patch, W//patch, out_ch) with nhwc_out=True (skips one transpose).
    """
    B, C, H, W = x_nchw.shape
    Ph, Pw = H // patch, W // patch
    K = C * patch * patch

    wf_p, bf_p, wh_p, bh_p = prepped["wf"], prepped["bf"], prepped["wh"], prepped["bh"]
    K_pad, E_pad = wf_p.shape
    O_pad = wh_p.shape[1]

    # Glue: bf16 cast FIRST so the patch-extraction transpose moves half the
    # bytes, then non-overlapping patches -> (M, K) rows (NCHW order).
    xp = x_nchw.astype(jnp.bfloat16).reshape(B, C, Ph, patch, Pw, patch)
    xp = xp.transpose(0, 2, 4, 1, 3, 5).reshape(B * Ph * Pw, K)
    M = B * Ph * Pw

    # Per-generation VMEM policy.
    vmem_cap = _vmem_capacity_bytes()
    tm = _choose_tm(M, K_pad, E_pad, O_pad, budget_bytes=int(vmem_cap * 0.65))
    M_pad = _round_up(M, tm)

    xp_p = jnp.pad(xp, ((0, M_pad - M), (0, K_pad - K)))        # zero pad, inert

    flops = 2 * M_pad * (K_pad * E_pad + E_pad * O_pad)
    bytes_accessed = (M_pad * K_pad * 2 + K_pad * E_pad * 2 + E_pad * 4
                      + E_pad * O_pad * 2 + O_pad * 4 + M_pad * O_pad * 4)

    grid = (M_pad // tm,)
    out_pad = pl.pallas_call(
        model_com_kernel,
        out_shape=jax.ShapeDtypeStruct((M_pad, O_pad), jnp.float32),
        grid=grid,
        in_specs=[
            pl.BlockSpec((tm, K_pad), lambda i: (i, 0)),        # xp: tiled over M
            pl.BlockSpec((K_pad, E_pad), lambda i: (0, 0)),     # resident weights
            pl.BlockSpec((1, E_pad), lambda i: (0, 0)),
            pl.BlockSpec((E_pad, O_pad), lambda i: (0, 0)),
            pl.BlockSpec((1, O_pad), lambda i: (0, 0)),
        ],
        out_specs=pl.BlockSpec((tm, O_pad), lambda i: (i, 0)),
        compiler_params=pltpu.CompilerParams(
            dimension_semantics=("parallel",),
            vmem_limit_bytes=min(int(vmem_cap * 0.85), 110 << 20),
        ),
        cost_estimate=pl.CostEstimate(flops=flops, transcendentals=0,
                                      bytes_accessed=bytes_accessed),
    )(xp_p, wf_p, bf_p, wh_p, bh_p)

    # Strip padding; output is naturally (B, Ph, Pw, O) == NHWC low-res logits.
    out = out_pad[:M, :out_ch].reshape(B, Ph, Pw, out_ch)
    if nhwc_out:
        return out
    return out.transpose(0, 3, 1, 2)                            # NCHW parity


# --------------------------- deterministic init ----------------------------- #
def init_params(key, in_ch, patch, emb_dim, out_ch):
    K = in_ch * patch * patch
    k1, k2, k3 = jax.random.split(key, 3)
    scale_pe = 1.0 / jnp.sqrt(K)
    scale_hd = 1.0 / jnp.sqrt(emb_dim)
    return {
        "w_pe":   jax.random.normal(k1, (K, emb_dim), jnp.float32) * scale_pe,
        "b_pe":   jnp.zeros((1, emb_dim), jnp.float32),
        "w_in":   jax.random.normal(k2, (K, emb_dim), jnp.float32) * scale_pe,
        "b_in":   jnp.full((1, emb_dim), 0.01, jnp.float32),
        "w_head": jax.random.normal(k3, (emb_dim, out_ch), jnp.float32) * scale_hd,
        "b_head": jnp.zeros((1, out_ch), jnp.float32),
    }


# ------------------------------ reference ----------------------------------- #
def model_com_reference(x_nchw, params, *, patch):
    """Pure-JAX f32 reference of the same forward (for tolerance checking)."""
    B, C, H, W = x_nchw.shape
    Ph, Pw = H // patch, W // patch
    xp = x_nchw.reshape(B, C, Ph, patch, Pw, patch)
    xp = xp.transpose(0, 2, 4, 1, 3, 5).reshape(B * Ph * Pw, C * patch * patch)
    emb = xp @ params["w_pe"] + params["b_pe"]          # image_encoder (detached)
    proj = xp @ params["w_in"] + params["b_in"]         # model: input projection
    h = jnp.maximum(proj + emb, 0.0)
    out = h @ params["w_head"] + params["b_head"]
    O = params["w_head"].shape[1]
    return out.reshape(B, Ph, Pw, O).transpose(0, 3, 1, 2)


if __name__ == "__main__":
    # Small shapes consistent with the forward: batch=2, channels=4, spatial=16.
    B, C, H, W = 2, 4, 16, 16
    PATCH = 4
    EMB_DIM = 32
    OUT_CH = 8

    key = jax.random.PRNGKey(0)
    kx, kp = jax.random.split(key)
    x = jax.random.normal(kx, (B, C, H, W), jnp.float32)
    params = init_params(kp, C, PATCH, EMB_DIM, OUT_CH)

    # One-time weight fold/pad/cast (hoisted out of the per-call forward).
    prepped = prepare_params(params)

    out = model_com_forward(x, prepped, patch=PATCH, out_ch=OUT_CH)
    out = jax.block_until_ready(out)

    assert out.shape == (B, OUT_CH, H // PATCH, W // PATCH), out.shape
    assert jnp.all(jnp.isfinite(out))

    # Loose tolerance (bf16 MXU inputs + folded-weight rounding, f32 accumulation).
    ref = model_com_reference(x, params, patch=PATCH)
    max_err = float(jnp.max(jnp.abs(out - ref)))
    assert max_err < 0.25, f"max abs err vs f32 reference: {max_err}"

    print("KERNEL_OK")
</pallas_src>

<mosaic_0001>
module attributes {stable_mosaic.version = 11 : i64} {
  func.func @model_com_kernel(%arg0: i32, %arg1: memref<32x128xbf16, #tpu.memory_space<vmem>>, %arg2: memref<128x128xbf16, #tpu.memory_space<vmem>>, %arg3: memref<1x128xf32, #tpu.memory_space<vmem>>, %arg4: memref<128x128xbf16, #tpu.memory_space<vmem>>, %arg5: memref<1x128xf32, #tpu.memory_space<vmem>>, %arg6: memref<32x128xf32, #tpu.memory_space<vmem>>) attributes {dimension_semantics = [#tpu.dimension_semantics<parallel>], iteration_bounds = array<i64: 1>, scalar_prefetch = 0 : i64, scratch_operands = 0 : i64, tpu.core_type = #tpu.core_type<tc>, window_params = [{transform_indices = @transform_0, window_bounds = array<i64: 32, 128>}, {pipeline_mode = #tpu.pipeline_mode<synchronous>, transform_indices = @transform_1, window_bounds = array<i64: 128, 128>}, {pipeline_mode = #tpu.pipeline_mode<synchronous>, transform_indices = @transform_2, window_bounds = array<i64: 1, 128>}, {pipeline_mode = #tpu.pipeline_mode<synchronous>, transform_indices = @transform_3, window_bounds = array<i64: 128, 128>}, {pipeline_mode = #tpu.pipeline_mode<synchronous>, transform_indices = @transform_4, window_bounds = array<i64: 1, 128>}, {transform_indices = @transform_5, window_bounds = array<i64: 32, 128>}]} {
    %c0 = arith.constant 0 : index
    %c0_0 = arith.constant 0 : index
    %0 = vector.load %arg1[%c0, %c0_0] : memref<32x128xbf16, #tpu.memory_space<vmem>>, vector<32x128xbf16>
    %c0_1 = arith.constant 0 : index
    %c0_2 = arith.constant 0 : index
    %1 = vector.load %arg2[%c0_1, %c0_2] : memref<128x128xbf16, #tpu.memory_space<vmem>>, vector<128x128xbf16>
    %cst = arith.constant dense<0.000000e+00> : vector<32x128xf32>
    %2 = tpu.matmul %0, %1, %cst {dimension_numbers = #tpu.dot_dimension_numbers<[1], [0], [0], [1], [0, 0, 1, 1], [], []>} : vector<32x128xbf16>, vector<128x128xbf16>, vector<32x128xf32> -> vector<32x128xf32>
    %c0_3 = arith.constant 0 : index
    %c0_4 = arith.constant 0 : index
    %3 = vector.load %arg3[%c0_3, %c0_4] : memref<1x128xf32, #tpu.memory_space<vmem>>, vector<1x128xf32>
    %4 = vector.broadcast %3 : vector<1x128xf32> to vector<32x128xf32>
    %5 = arith.addf %2, %4 : vector<32x128xf32>
    %cst_5 = arith.constant 0.000000e+00 : f32
    %6 = vector.broadcast %cst_5 : f32 to vector<32x128xf32>
    %7 = arith.maximumf %5, %6 : vector<32x128xf32>
    %8 = arith.truncf %7 : vector<32x128xf32> to vector<32x128xbf16>
    %c0_6 = arith.constant 0 : index
    %c0_7 = arith.constant 0 : index
    %9 = vector.load %arg4[%c0_6, %c0_7] : memref<128x128xbf16, #tpu.memory_space<vmem>>, vector<128x128xbf16>
    %cst_8 = arith.constant dense<0.000000e+00> : vector<32x128xf32>
    %10 = tpu.matmul %8, %9, %cst_8 {dimension_numbers = #tpu.dot_dimension_numbers<[1], [0], [0], [1], [0, 0, 1, 1], [], []>} : vector<32x128xbf16>, vector<128x128xbf16>, vector<32x128xf32> -> vector<32x128xf32>
    %c0_9 = arith.constant 0 : index
    %c0_10 = arith.constant 0 : index
    %11 = vector.load %arg5[%c0_9, %c0_10] : memref<1x128xf32, #tpu.memory_space<vmem>>, vector<1x128xf32>
    %12 = vector.broadcast %11 : vector<1x128xf32> to vector<32x128xf32>
    %13 = arith.addf %10, %12 : vector<32x128xf32>
    %c0_11 = arith.constant 0 : index
    %c0_12 = arith.constant 0 : index
    %14 = vector.load %arg6[%c0_11, %c0_12] : memref<32x128xf32, #tpu.memory_space<vmem>>, vector<32x128xf32>
    tpu.vector_store %arg6[%c0_11, %c0_12], %13 {strides = array<i32>} : memref<32x128xf32, #tpu.memory_space<vmem>>, vector<32x128xf32>,
    return
  }
  func.func @transform_0(%arg0: i32) -> (i32, i32) {
    %c0_i32 = arith.constant 0 : i32
    %c0_i32_0 = arith.constant 0 : i32
    return %arg0, %c0_i32 : i32, i32
  }
  func.func @transform_1(%arg0: i32) -> (i32, i32) {
    %c0_i32 = arith.constant 0 : i32
    %c0_i32_0 = arith.constant 0 : i32
    %c0_i32_1 = arith.constant 0 : i32
    return %c0_i32, %c0_i32_0 : i32, i32
  }
  func.func @transform_2(%arg0: i32) -> (i32, i32) {
    %c0_i32 = arith.constant 0 : i32
    %c0_i32_0 = arith.constant 0 : i32
    %c0_i32_1 = arith.constant 0 : i32
    return %c0_i32, %c0_i32_0 : i32, i32
  }
  func.func @transform_3(%arg0: i32) -> (i32, i32) {
    %c0_i32 = arith.constant 0 : i32
    %c0_i32_0 = arith.constant 0 : i32
    %c0_i32_1 = arith.constant 0 : i32
    return %c0_i32, %c0_i32_0 : i32, i32
  }
  func.func @transform_4(%arg0: i32) -> (i32, i32) {
    %c0_i32 = arith.constant 0 : i32
    %c0_i32_0 = arith.constant 0 : i32
    %c0_i32_1 = arith.constant 0 : i32
    return %c0_i32, %c0_i32_0 : i32, i32
  }
  func.func @transform_5(%arg0: i32) -> (i32, i32) {
    %c0_i32 = arith.constant 0 : i32
    %c0_i32_0 = arith.constant 0 : i32
    return %arg0, %c0_i32 : i32, i32
  }
}

</mosaic_0001>

<llo_original>
// kernel: model_com_forward.1
$region0: #{model_com_forward.1}
  #allocation0 [shape = 'u32[]', space=smem, size = 0x4, offset = 0x4, fixed_abs, tag = 'smem constant byte address 0x4 - core index']
  #allocation1 [shape = 'u32[144,128]{1,0:T(1,128)}', space=vmem, size = 0x12000, scoped, tag = 'internal scratch']
  %s0 = inlined_call_operand.vmem [shape: bf16[32,128], index: 0, kind: input, shape index: {}]
  %s1 = inlined_call_operand.vmem [shape: bf16[128,128], index: 1, kind: input, shape index: {}]
  %s2 = inlined_call_operand.vmem [shape: f32[1,128], index: 2, kind: input, shape index: {}]
  %s3 = inlined_call_operand.vmem [shape: bf16[128,128], index: 3, kind: input, shape index: {}]
  %s4 = inlined_call_operand.vmem [shape: f32[1,128], index: 4, kind: input, shape index: {}]
  %s5 = inlined_call_operand.hbm [shape: f32[32,128], index: 5, kind: output, shape index: {}]
  %s6 = sld [smem:[#allocation0]]
  $region30: #{model_com_forward.1} parent=0
    _
  %s8 = ssub.s32 1, %s6
  %s9 = scalar_select 0, %s8, %s6
  $region1: #{model_com_forward.1} parent=0
    #allocation2 [shape = 'u8[16384]{0}', space=vmem, size = 0x4000, scoped, tag = 'output window, operand 0, single buffered']
    #allocation3 [shape = 's32[1]{0}', space=sflag, size = 0x4, scoped, tag = 'scoped memory for model_com_forward.1']
    %10 = vsyncpa [#allocation3], 0
    // Predicated region
    $region2: #{model_com_forward.1} parent=1 // pred_check
      _
    $region3: #{model_com_forward.1} parent=1 // pred_check_branch
      %12 = sbr.rel (0) target = $region5
    $region4: #{model_com_forward.1} parent=1 // pred_region
      _
    $region5: #{model_com_forward.1} parent=1 // pred_fallthru
      _
    // Predicated region
    $region6: #{model_com_forward.1} parent=1 // pred_check
      _
    $region7: #{model_com_forward.1} parent=1 // pred_check_branch
      %14 = sbr.rel (0) target = $region9
    $region8: #{model_com_forward.1} parent=1 // pred_region
      _
    $region9: #{model_com_forward.1} parent=1 // pred_fallthru
      _
    // Predicated region
    $region10: #{model_com_forward.1} parent=1 // pred_check
      _
    $region11: #{model_com_forward.1} parent=1 // pred_check_branch
      %16 = sbr.rel (0) target = $region13
    $region12: #{model_com_forward.1} parent=1 // pred_region
      _
    $region13: #{model_com_forward.1} parent=1 // pred_fallthru
      _
    // Predicated region
    $region14: #{model_com_forward.1} parent=1 // pred_check
      _
    $region15: #{model_com_forward.1} parent=1 // pred_check_branch
      %18 = sbr.rel (0) target = $region17
    $region16: #{model_com_forward.1} parent=1 // pred_region
      _
    $region17: #{model_com_forward.1} parent=1 // pred_fallthru
      _
    // Predicated region
    $region18: #{model_com_forward.1} parent=1 // pred_check
      _
    $region19: #{model_com_forward.1} parent=1 // pred_check_branch
      %20 = sbr.rel (0) target = $region21
    $region20: #{model_com_forward.1} parent=1 // pred_region
      _
    $region21: #{model_com_forward.1} parent=1 // pred_fallthru
      _
    %v22 = vld [vmem:[%s0] sm:$0xf]
    %v23 = vld [vmem:[%s0 + $0x4] sm:$0xf]
    %v24 = vld [vmem:[%s0 + $0x8] sm:$0xf]
    %v25 = vld [vmem:[%s0 + $0xc] sm:$0xf]
    %v26 = vld [vmem:[%s1] sm:$0xf]
    %v27 = vld [vmem:[%s1 + $0x4] sm:$0xf]
    %v28 = vld [vmem:[%s1 + $0x8] sm:$0xf]
    %v29 = vld [vmem:[%s1 + $0xc] sm:$0xf]
    %v30 = vld [vmem:[%s1 + $0x10] sm:$0xf]
    %v31 = vld [vmem:[%s1 + $0x14] sm:$0xf]
    %v32 = vld [vmem:[%s1 + $0x18] sm:$0xf]
    %v33 = vld [vmem:[%s1 + $0x1c] sm:$0xf]
    %v34 = vld [vmem:[%s1 + $0x20] sm:$0xf]
    %v35 = vld [vmem:[%s1 + $0x24] sm:$0xf]
    %v36 = vld [vmem:[%s1 + $0x28] sm:$0xf]
    %v37 = vld [vmem:[%s1 + $0x2c] sm:$0xf]
    %v38 = vld [vmem:[%s1 + $0x30] sm:$0xf]
    %v39 = vld [vmem:[%s1 + $0x34] sm:$0xf]
    %v40 = vld [vmem:[%s1 + $0x38] sm:$0xf]
    %v41 = vld [vmem:[%s1 + $0x3c] sm:$0xf]
    %v42 = vld [vmem:[%s2] sm:$0x1]
    %v44 = vlaneseq
    %v45 = vshrl.u32 %v44, 7
    %v46 = vsub.s32 0, %v45
    %v47 = vrot.slane %v42, %v46
    %v53 = vunpack.c.l.b16 %v22
    %v54 = vunpack.c.l.b16 %v23
    %v55 = vunpack.c.l.b16 %v24
    %v56 = vunpack.c.l.b16 %v25
    %v57 = vpack.c.b16 %v54, %v53
    %v58 = vpack.c.b16 %v56, %v55
    %v77 = vunpack.c.l.b16 %v26
    %v78 = vunpack.c.l.b16 %v27
    %v79 = vunpack.c.l.b16 %v28
    %v80 = vunpack.c.l.b16 %v29
    %v81 = vunpack.c.l.b16 %v30
    %v82 = vunpack.c.l.b16 %v31
    %v83 = vunpack.c.l.b16 %v32
    %v84 = vunpack.c.l.b16 %v33
    %v85 = vunpack.c.l.b16 %v34
    %v86 = vunpack.c.l.b16 %v35
    %v87 = vunpack.c.l.b16 %v36
    %v88 = vunpack.c.l.b16 %v37
    %v89 = vunpack.c.l.b16 %v38
    %v90 = vunpack.c.l.b16 %v39
    %v91 = vunpack.c.l.b16 %v40
    %v92 = vunpack.c.l.b16 %v41
    %v93 = vpack.c.b16 %v78, %v77
    %v94 = vpack.c.b16 %v80, %v79
    %v95 = vpack.c.b16 %v82, %v81
    %v96 = vpack.c.b16 %v84, %v83
    %v97 = vpack.c.b16 %v86, %v85
    %v98 = vpack.c.b16 %v88, %v87
    %v99 = vpack.c.b16 %v90, %v89
    %v100 = vpack.c.b16 %v92, %v91
    %109 = vmatprep.subr.bf16.mxu0 0
    %110 = vmatpush1.bf16.msra.mxu0 %v93
    %111 = vmatprep.subr.bf16.mxu0 0
    %112 = vmatpush1.bf16.msra.mxu0 %v94
    %113 = vmatprep.subr.bf16.mxu0 0
    %114 = vmatpush1.bf16.msra.mxu0 %v95
    %115 = vmatprep.subr.bf16.mxu0 0
    %116 = vmatpush1.bf16.msra.mxu0 %v96
    %117 = vmatprep.subr.bf16.mxu0 0
    %118 = vmatpush1.bf16.msra.mxu0 %v97
    %119 = vmatprep.subr.bf16.mxu0 0
    %120 = vmatpush1.bf16.msra.mxu0 %v98
    %121 = vmatprep.subr.bf16.mxu0 0
    %122 = vmatpush1.bf16.msra.mxu0 %v99
    %123 = vmatprep.subr.bf16.mxu0 0
    %124 = vmatpush1.bf16.msra.mxu0 %v100
    %125 = vmatprep.subr.bf16.mxu0 0
    %126 = vmatpush1.bf16.msra.mxu0 0
    %127 = vmatprep.subr.bf16.mxu0 0
    %128 = vmatpush1.bf16.msra.mxu0 0
    %129 = vmatprep.subr.bf16.mxu0 0
    %130 = vmatpush1.bf16.msra.mxu0 0
    %131 = vmatprep.subr.bf16.mxu0 0
    %132 = vmatpush1.bf16.msra.mxu0 0
    %133 = vmatprep.subr.bf16.mxu0 0
    %134 = vmatpush1.bf16.msra.mxu0 0
    %135 = vmatprep.subr.bf16.mxu0 0
    %136 = vmatpush1.bf16.msra.mxu0 0
    %137 = vmatprep.subr.bf16.mxu0 0
    %138 = vmatpush1.bf16.msra.mxu0 0
    %139 = vmatprep.subr.bf16.mxu0 0
    %140 = vmatpush1.bf16.msra.mxu0 0
    %141 = vmatprep.mubr.bf16.mxu0 0
    %142 = vmatmul.mubr.bf16.gmra.mrb[0].mxu0 %v57
    %v143 = vpop.f32.mrb[0].mxu0
    %v144 = vadd.f32 %v47, %v143
    %v145 = vpop.f32.mrb[0].mxu0
    %v146 = vpop.f32.mrb[0].mxu0
    %v147 = vadd.f32 %v47, %v146
    %v148 = vpop.f32.mrb[0].mxu0
    %149 = vmatprep.mubr.bf16.mxu0 0
    %150 = vmatmul.mubr.bf16.gmra.mrb[0].mxu0 %v58
    %v151 = vpop.f32.mrb[0].mxu0
    %v152 = vadd.f32 %v47, %v151
    %v153 = vpop.f32.mrb[0].mxu0
    %v154 = vpop.f32.mrb[0].mxu0
    %v155 = vadd.f32 %v47, %v154
    %v156 = vpop.f32.mrb[0].mxu0
    %157 = vdwg.mxu0
    %v158 = vmax.f32 %v144, 0.0
    %v159 = vmax.f32 %v147, 0.0
    %v160 = vmax.f32 %v152, 0.0
    %v161 = vmax.f32 %v155, 0.0
    %v162 = vpack.c.bf16 %v159, %v158
    %v163 = vpack.c.bf16 %v161, %v160
    %v164 = vld [vmem:[%s3] sm:$0xf]
    %v165 = vld [vmem:[%s3 + $0x4] sm:$0xf]
    %v166 = vld [vmem:[%s3 + $0x8] sm:$0xf]
    %v167 = vld [vmem:[%s3 + $0xc] sm:$0xf]
    %v168 = vld [vmem:[%s3 + $0x10] sm:$0xf]
    %v169 = vld [vmem:[%s3 + $0x14] sm:$0xf]
    %v170 = vld [vmem:[%s3 + $0x18] sm:$0xf]
    %v171 = vld [vmem:[%s3 + $0x1c] sm:$0xf]
    %v172 = vld [vmem:[%s3 + $0x20] sm:$0xf]
    %v173 = vld [vmem:[%s3 + $0x24] sm:$0xf]
    %v174 = vld [vmem:[%s3 + $0x28] sm:$0xf]
    %v175 = vld [vmem:[%s3 + $0x2c] sm:$0xf]
    %v176 = vld [vmem:[%s3 + $0x30] sm:$0xf]
    %v177 = vld [vmem:[%s3 + $0x34] sm:$0xf]
    %v178 = vld [vmem:[%s3 + $0x38] sm:$0xf]
    %v179 = vld [vmem:[%s3 + $0x3c] sm:$0xf]
    %v180 = vld [vmem:[%s4] sm:$0x1]
    %v182 = vlaneseq
    %v183 = vshrl.u32 %v182, 7
    %v184 = vsub.s32 0, %v183
    %v185 = vrot.slane %v180, %v184
    %v203 = vunpack.c.l.b16 %v164
    %v204 = vunpack.c.l.b16 %v165
    %v205 = vunpack.c.l.b16 %v166
    %v206 = vunpack.c.l.b16 %v167
    %v207 = vunpack.c.l.b16 %v168
    %v208 = vunpack.c.l.b16 %v169
    %v209 = vunpack.c.l.b16 %v170
    %v210 = vunpack.c.l.b16 %v171
    %v211 = vunpack.c.l.b16 %v172
    %v212 = vunpack.c.l.b16 %v173
    %v213 = vunpack.c.l.b16 %v174
    %v214 = vunpack.c.l.b16 %v175
    %v215 = vunpack.c.l.b16 %v176
    %v216 = vunpack.c.l.b16 %v177
    %v217 = vunpack.c.l.b16 %v178
    %v218 = vunpack.c.l.b16 %v179
    %v219 = vpack.c.b16 %v204, %v203
    %v220 = vpack.c.b16 %v206, %v205
    %v221 = vpack.c.b16 %v208, %v207
    %v222 = vpack.c.b16 %v210, %v209
    %v223 = vpack.c.b16 %v212, %v211
    %v224 = vpack.c.b16 %v214, %v213
    %v225 = vpack.c.b16 %v216, %v215
    %v226 = vpack.c.b16 %v218, %v217
    %235 = vmatprep.subr.bf16.mxu0 0
    %236 = vmatpush1.bf16.msra.mxu0 %v219
    %237 = vmatprep.subr.bf16.mxu0 0
    %238 = vmatpush1.bf16.msra.mxu0 %v220
    %239 = vmatprep.subr.bf16.mxu0 0
    %240 = vmatpush1.bf16.msra.mxu0 %v221
    %241 = vmatprep.subr.bf16.mxu0 0
    %242 = vmatpush1.bf16.msra.mxu0 %v222
    %243 = vmatprep.subr.bf16.mxu0 0
    %244 = vmatpush1.bf16.msra.mxu0 %v223
    %245 = vmatprep.subr.bf16.mxu0 0
    %246 = vmatpush1.bf16.msra.mxu0 %v224
    %247 = vmatprep.subr.bf16.mxu0 0
    %248 = vmatpush1.bf16.msra.mxu0 %v225
    %249 = vmatprep.subr.bf16.mxu0 0
    %250 = vmatpush1.bf16.msra.mxu0 %v226
    %251 = vmatprep.subr.bf16.mxu0 0
    %252 = vmatpush1.bf16.msra.mxu0 0
    %253 = vmatprep.subr.bf16.mxu0 0
    %254 = vmatpush1.bf16.msra.mxu0 0
    %255 = vmatprep.subr.bf16.mxu0 0
    %256 = vmatpush1.bf16.msra.mxu0 0
    %257 = vmatprep.subr.bf16.mxu0 0
    %258 = vmatpush1.bf16.msra.mxu0 0
    %259 = vmatprep.subr.bf16.mxu0 0
    %260 = vmatpush1.bf16.msra.mxu0 0
    %261 = vmatprep.subr.bf16.mxu0 0
    %262 = vmatpush1.bf16.msra.mxu0 0
    %263 = vmatprep.subr.bf16.mxu0 0
    %264 = vmatpush1.bf16.msra.mxu0 0
    %265 = vmatprep.subr.bf16.mxu0 0
    %266 = vmatpush1.bf16.msra.mxu0 0
    %267 = vmatprep.mubr.bf16.mxu0 0
    %268 = vmatmul.mubr.bf16.gmra.mrb[0].mxu0 %v162
    %v269 = vpop.f32.mrb[0].mxu0
    %v270 = vadd.f32 %v185, %v269
    %v271 = vpop.f32.mrb[0].mxu0
    %v272 = vpop.f32.mrb[0].mxu0
    %v273 = vadd.f32 %v185, %v272
    %v274 = vpop.f32.mrb[0].mxu0
    %275 = vmatprep.mubr.bf16.mxu0 0
    %276 = vmatmul.mubr.bf16.gmra.mrb[0].mxu0 %v163
    %v277 = vpop.f32.mrb[0].mxu0
    %v278 = vadd.f32 %v185, %v277
    %v279 = vpop.f32.mrb[0].mxu0
    %v280 = vpop.f32.mrb[0].mxu0
    %v281 = vadd.f32 %v185, %v280
    %v282 = vpop.f32.mrb[0].mxu0
    %283 = vdwg.mxu0
    %284 = vst [vmem:[#allocation2] sm:$0xff] %v270
    %285 = vst [vmem:[#allocation2 + $0x8] sm:$0xff] %v273
    %286 = vst [vmem:[#allocation2 + $0x10] sm:$0xff] %v278
    %287 = vst [vmem:[#allocation2 + $0x18] sm:$0xff] %v281
    // Predicated region
    $region22: #{model_com_forward.1} parent=1 // pred_check
      _
    $region23: #{model_com_forward.1} parent=1 // pred_check_branch
      %289 = sbr.rel (0) target = $region25
    $region24: #{model_com_forward.1} parent=1 // pred_region
      %s291 = ssub.s32 512, 512
      %292 = vsyncadd [#allocation3], %s291
      %s293 = sshll.u32 [#allocation2], 4
      %s294 = int_to_ptr.vmem [resolvable:$true] %s293
      %299 = dma.vmem_to_hbm [thread:$0]  %s294, 512, %s5, [#allocation3], 128, 128, 8
    $region25: #{model_com_forward.1} parent=1 // pred_fallthru
      _
    // Predicated region
    $region26: #{model_com_forward.1} parent=1 // pred_check
      _
    $region27: #{model_com_forward.1} parent=1 // pred_check_branch
      %301 = sbr.rel (0) target = $region29
    $region28: #{model_com_forward.1} parent=1 // pred_region
      %302 = dma.done [#allocation3], 512
    $region29: #{model_com_forward.1} parent=1 // pred_fallthru
      _
    %303 = vsyncpa [#allocation3], 1

</llo_original>
